<compile_context>
chip_gen: v5e
topology: v5e:2x2
jax: 0.10.0
libtpu: 0.0.40
codegen_flags: <defaults>
</compile_context>

<pallas_src>
import functools

import jax
import jax.numpy as jnp
from jax import lax
from jax.experimental import pallas as pl
from jax.experimental.pallas import tpu as pltpu


def _attention_kernel(x_ref, wq_ref, wk_ref, wv_ref, wout_ref, bout_ref, o_ref,
                      q_s, k_s, v_s, ctx_s, *, heads, dim_head, block_b, seq_len):
    """One grid step handles `block_b` batch elements.

    x_ref, o_ref : [block_b * N, D]          (batch folded into rows)
    wq/wk/wv_ref : [D, inner]                (softmax scale folded into Wq)
    wout_ref     : [inner, D]
    bout_ref     : [1, D]
    q_s/k_s/v_s/ctx_s : VMEM scratch [block_b * N, inner] in x.dtype
    """
    n = seq_len
    cdt = x_ref.dtype  # MXU operand dtype (bf16 stays bf16); accumulation is f32.

    xf = x_ref[...]                                                  # [bb*N, D]

    # ---- Stage 1: QKV projection as full-width matmuls (M = block_b*N). ----
    q_s[...] = jnp.dot(xf, wq_ref[...], preferred_element_type=jnp.float32).astype(cdt)
    k_s[...] = jnp.dot(xf, wk_ref[...], preferred_element_type=jnp.float32).astype(cdt)
    v_s[...] = jnp.dot(xf, wv_ref[...], preferred_element_type=jnp.float32).astype(cdt)

    # ---- Stage 2: per-(batch, head) scores / softmax / PV. ------------------
    # fori_loop over batch elements bounds live ranges; heads are unrolled in
    # the body with static dim_head-wide lane slices, giving Mosaic a stream of
    # independent MXU (scores/PV), XLU (row max/sum) and EUP (exp, reciprocal)
    # ops to overlap.
    def batch_body(b, carry):
        r0 = pl.multiple_of(b * n, n)
        for h in range(heads):
            c0 = h * dim_head                                        # static
            qh = q_s[pl.ds(r0, n), pl.ds(c0, dim_head)]              # [N, dh]
            kh = k_s[pl.ds(r0, n), pl.ds(c0, dim_head)]
            vh = v_s[pl.ds(r0, n), pl.ds(c0, dim_head)]
            s = jnp.einsum('nd,md->nm', qh, kh,
                           preferred_element_type=jnp.float32)       # [N, N]
            s = s - jnp.max(s, axis=-1, keepdims=True)               # f32 softmax
            e = jnp.exp(s)
            p = e * pl.reciprocal(jnp.sum(e, axis=-1, keepdims=True), approx=True)
            ctx = jnp.dot(p.astype(cdt), vh,
                          preferred_element_type=jnp.float32)        # [N, dh]
            ctx_s[pl.ds(r0, n), pl.ds(c0, dim_head)] = ctx.astype(cdt)
        return carry

    lax.fori_loop(0, block_b, batch_body, 0)

    # ---- Stage 3: fused output projection over the full inner dim. ----------
    y = jnp.dot(ctx_s[...], wout_ref[...], preferred_element_type=jnp.float32)
    y = y + bout_ref[...].astype(jnp.float32)                        # [1, D] bcast
    o_ref[...] = y.astype(o_ref.dtype)


def _vmem_budget():
    """(vmem_limit_bytes, usable budget for block sizing)."""
    try:
        cap = int(pltpu.get_tpu_info().vmem_capacity_bytes)
    except Exception:
        cap = 64 * 1024 * 1024          # conservative: v7x per-TC VMEM
    limit = min(int(cap * 0.75), 100 * 1024 * 1024)
    return limit, int(limit * 0.6)


def _step_vmem_bytes(bb, n, d, inner, itemsize):
    io = 2 * (bb * n * d * itemsize) * 2                    # x + o blocks, 2 buffers
    w = (3 * d * inner + inner * d + d) * itemsize * 2      # resident weights/bias
    scratch = 4 * bb * n * inner * itemsize                 # q/k/v/ctx scratch
    live = 3 * bb * n * inner * 4 + bb * n * d * 4 + 2 * n * n * 4  # f32 transients
    return int((io + w + scratch + live) * 1.25)            # slop for padding/vregs


def _pick_block_b(B, n, d, inner, itemsize, budget):
    fits = [bb for bb in range(1, B + 1)
            if B % bb == 0
            and ((bb * n) % 8 == 0 or bb == B)               # (8,128) sublane rule
            and _step_vmem_bytes(bb, n, d, inner, itemsize) <= budget]
    if not fits:
        return 1 if (n % 8 == 0 or B == 1) else B
    even = [bb for bb in fits if (B // bb) % 2 == 0]
    # Prefer the largest block that still leaves an even step count (keeps both
    # v7x TensorCores busy); otherwise take the largest fitting block — on the
    # single-TC v5e/v6e extra steps are pure (~0.35 us) overhead.
    return max(even) if even else max(fits)


def attention_forward(x, w_qkv, w_out, b_out, *, heads, dim_head, block_b=None):
    """x: [B, N, D], w_qkv: [D, 3*heads*dim_head], w_out: [heads*dim_head, D],
    b_out: [1, D]  ->  [B, N, D]"""
    B, N, D = x.shape
    inner = heads * dim_head
    assert w_qkv.shape == (D, 3 * inner)
    assert w_out.shape == (inner, D)
    scale = dim_head ** (-0.5)
    cdt = x.dtype

    # Host-side weight plumbing: split fused qkv, fold the softmax scale into
    # Wq, and cast every MXU operand to x.dtype (explicit, no mixed-dtype dots).
    wq, wk, wv = jnp.split(w_qkv, 3, axis=-1)                         # each [D, inner]
    wq = (wq.astype(jnp.float32) * scale).astype(cdt)
    wk = wk.astype(cdt)
    wv = wv.astype(cdt)
    wo = w_out.astype(cdt)
    bo = b_out.reshape(1, D).astype(cdt)

    vmem_limit, vmem_budget = _vmem_budget()
    itemsize = jnp.dtype(cdt).itemsize
    if block_b is None:
        block_b = _pick_block_b(B, N, D, inner, itemsize, vmem_budget)
    assert B % block_b == 0
    grid = (B // block_b,)
    rows = block_b * N

    x2 = x.reshape(B * N, D)         # fold batch into the matmul M dimension

    kernel = functools.partial(_attention_kernel, heads=heads, dim_head=dim_head,
                               block_b=block_b, seq_len=N)

    out2 = pl.pallas_call(
        kernel,
        out_shape=jax.ShapeDtypeStruct((B * N, D), x.dtype),
        grid_spec=pltpu.PrefetchScalarGridSpec(
            num_scalar_prefetch=0,
            grid=grid,
            in_specs=[
                pl.BlockSpec((rows, D), lambda i: (i, 0)),            # x rows
                pl.BlockSpec((D, inner), lambda i: (0, 0)),           # Wq (scaled)
                pl.BlockSpec((D, inner), lambda i: (0, 0)),           # Wk
                pl.BlockSpec((D, inner), lambda i: (0, 0)),           # Wv
                pl.BlockSpec((inner, D), lambda i: (0, 0)),           # Wout
                pl.BlockSpec((1, D), lambda i: (0, 0)),               # bias
            ],
            out_specs=pl.BlockSpec((rows, D), lambda i: (i, 0)),
            scratch_shapes=[
                pltpu.VMEM((rows, inner), cdt),                       # q
                pltpu.VMEM((rows, inner), cdt),                       # k
                pltpu.VMEM((rows, inner), cdt),                       # v
                pltpu.VMEM((rows, inner), cdt),                       # context
            ],
        ),
        compiler_params=pltpu.CompilerParams(
            dimension_semantics=("parallel",),
            vmem_limit_bytes=vmem_limit),
    )(x2, wq, wk, wv, wo, bo)

    return out2.reshape(B, N, D)


def reference_attention(x, w_qkv, w_out, b_out, *, heads, dim_head):
    """Pure-JAX reference mirroring the PyTorch forward."""
    B, N, D = x.shape
    inner = heads * dim_head
    scale = dim_head ** (-0.5)
    qkv = x @ w_qkv                                                   # [B, N, 3*inner]
    q, k, v = jnp.split(qkv, 3, axis=-1)

    def to_heads(t):  # 'b n (h d) -> b h n d'
        return t.reshape(B, N, heads, dim_head).transpose(0, 2, 1, 3)

    q, k, v = map(to_heads, (q, k, v))
    dots = jnp.einsum("bhnd,bhmd->bhnm", q, k) * scale
    attn = jax.nn.softmax(dots, axis=-1)
    out = jnp.einsum("bhnm,bhmd->bhnd", attn, v)
    out = out.transpose(0, 2, 1, 3).reshape(B, N, inner)              # 'b h n d -> b n (h d)'
    return out @ w_out + b_out


if __name__ == "__main__":
    # Small shapes consistent with the module: dim=32, heads=4, dim_head=16.
    B, N, D = 2, 8, 32
    HEADS, DIM_HEAD = 4, 16
    INNER = HEADS * DIM_HEAD

    key = jax.random.PRNGKey(0)
    kx, kqkv, kwo, kbo = jax.random.split(key, 4)

    x = jax.random.normal(kx, (B, N, D), dtype=jnp.float32)
    # Deterministic parameter init (nn.Linear-like uniform scaling).
    w_qkv = jax.random.uniform(kqkv, (D, 3 * INNER), jnp.float32,
                               minval=-1.0, maxval=1.0) * (D ** -0.5)
    w_out = jax.random.uniform(kwo, (INNER, D), jnp.float32,
                               minval=-1.0, maxval=1.0) * (INNER ** -0.5)
    b_out = jax.random.uniform(kbo, (1, D), jnp.float32,
                               minval=-1.0, maxval=1.0) * (INNER ** -0.5)

    out = attention_forward(x, w_qkv, w_out, b_out, heads=HEADS, dim_head=DIM_HEAD)
    out = jax.block_until_ready(out)

    ref = reference_attention(x, w_qkv, w_out, b_out, heads=HEADS, dim_head=DIM_HEAD)
    assert out.shape == (B, N, D)
    err = jnp.max(jnp.abs(out - ref))
    # Tolerance accounts for the approx (EUP) reciprocal in the softmax denom.
    assert jnp.allclose(out, ref, atol=2e-3, rtol=2e-3), f"max err {err}"

    print("KERNEL_OK")
</pallas_src>

<mosaic_0001>
module attributes {stable_mosaic.version = 11 : i64} {
  func.func @_attention_kernel(%arg0: i32, %arg1: memref<8x32xf32, #tpu.memory_space<vmem>>, %arg2: memref<32x64xf32, #tpu.memory_space<vmem>>, %arg3: memref<32x64xf32, #tpu.memory_space<vmem>>, %arg4: memref<32x64xf32, #tpu.memory_space<vmem>>, %arg5: memref<64x32xf32, #tpu.memory_space<vmem>>, %arg6: memref<1x32xf32, #tpu.memory_space<vmem>>, %arg7: memref<8x32xf32, #tpu.memory_space<vmem>>, %arg8: memref<8x64xf32, #tpu.memory_space<vmem>>, %arg9: memref<8x64xf32, #tpu.memory_space<vmem>>, %arg10: memref<8x64xf32, #tpu.memory_space<vmem>>, %arg11: memref<8x64xf32, #tpu.memory_space<vmem>>) attributes {dimension_semantics = [#tpu.dimension_semantics<parallel>], iteration_bounds = array<i64: 2>, scalar_prefetch = 0 : i64, scratch_operands = 4 : i64, tpu.core_type = #tpu.core_type<tc>, window_params = [{transform_indices = @transform_0, window_bounds = array<i64: 8, 32>}, {pipeline_mode = #tpu.pipeline_mode<synchronous>, transform_indices = @transform_1, window_bounds = array<i64: 32, 64>}, {pipeline_mode = #tpu.pipeline_mode<synchronous>, transform_indices = @transform_2, window_bounds = array<i64: 32, 64>}, {pipeline_mode = #tpu.pipeline_mode<synchronous>, transform_indices = @transform_3, window_bounds = array<i64: 32, 64>}, {pipeline_mode = #tpu.pipeline_mode<synchronous>, transform_indices = @transform_4, window_bounds = array<i64: 64, 32>}, {pipeline_mode = #tpu.pipeline_mode<synchronous>, transform_indices = @transform_5, window_bounds = array<i64: 1, 32>}, {transform_indices = @transform_6, window_bounds = array<i64: 8, 32>}]} {
    %c0 = arith.constant 0 : index
    %c0_0 = arith.constant 0 : index
    %0 = vector.load %arg1[%c0, %c0_0] : memref<8x32xf32, #tpu.memory_space<vmem>>, vector<8x32xf32>
    %c0_1 = arith.constant 0 : index
    %c0_2 = arith.constant 0 : index
    %1 = vector.load %arg2[%c0_1, %c0_2] : memref<32x64xf32, #tpu.memory_space<vmem>>, vector<32x64xf32>
    %cst = arith.constant dense<0.000000e+00> : vector<8x64xf32>
    %2 = tpu.matmul %0, %1, %cst {dimension_numbers = #tpu.dot_dimension_numbers<[1], [0], [0], [1], [0, 0, 1, 1], [], []>} : vector<8x32xf32>, vector<32x64xf32>, vector<8x64xf32> -> vector<8x64xf32>
    %c0_3 = arith.constant 0 : index
    %c0_4 = arith.constant 0 : index
    %3 = vector.load %arg8[%c0_3, %c0_4] : memref<8x64xf32, #tpu.memory_space<vmem>>, vector<8x64xf32>
    tpu.vector_store %arg8[%c0_3, %c0_4], %2 {strides = array<i32>} : memref<8x64xf32, #tpu.memory_space<vmem>>, vector<8x64xf32>,
    %c0_5 = arith.constant 0 : index
    %c0_6 = arith.constant 0 : index
    %4 = vector.load %arg3[%c0_5, %c0_6] : memref<32x64xf32, #tpu.memory_space<vmem>>, vector<32x64xf32>
    %cst_7 = arith.constant dense<0.000000e+00> : vector<8x64xf32>
    %5 = tpu.matmul %0, %4, %cst_7 {dimension_numbers = #tpu.dot_dimension_numbers<[1], [0], [0], [1], [0, 0, 1, 1], [], []>} : vector<8x32xf32>, vector<32x64xf32>, vector<8x64xf32> -> vector<8x64xf32>
    %c0_8 = arith.constant 0 : index
    %c0_9 = arith.constant 0 : index
    %6 = vector.load %arg9[%c0_8, %c0_9] : memref<8x64xf32, #tpu.memory_space<vmem>>, vector<8x64xf32>
    tpu.vector_store %arg9[%c0_8, %c0_9], %5 {strides = array<i32>} : memref<8x64xf32, #tpu.memory_space<vmem>>, vector<8x64xf32>,
    %c0_10 = arith.constant 0 : index
    %c0_11 = arith.constant 0 : index
    %7 = vector.load %arg4[%c0_10, %c0_11] : memref<32x64xf32, #tpu.memory_space<vmem>>, vector<32x64xf32>
    %cst_12 = arith.constant dense<0.000000e+00> : vector<8x64xf32>
    %8 = tpu.matmul %0, %7, %cst_12 {dimension_numbers = #tpu.dot_dimension_numbers<[1], [0], [0], [1], [0, 0, 1, 1], [], []>} : vector<8x32xf32>, vector<32x64xf32>, vector<8x64xf32> -> vector<8x64xf32>
    %c0_13 = arith.constant 0 : index
    %c0_14 = arith.constant 0 : index
    %9 = vector.load %arg10[%c0_13, %c0_14] : memref<8x64xf32, #tpu.memory_space<vmem>>, vector<8x64xf32>
    tpu.vector_store %arg10[%c0_13, %c0_14], %8 {strides = array<i32>} : memref<8x64xf32, #tpu.memory_space<vmem>>, vector<8x64xf32>,
    %c0_i32 = arith.constant 0 : i32
    %c8_i32 = arith.constant 8 : i32
    %10 = arith.muli %c0_i32, %c8_i32 : i32
    %11 = tpu.assume_multiple %10, 8 : i32
    %12 = arith.index_cast %11 : i32 to index
    %c0_15 = arith.constant 0 : index
    %13 = vector.load %arg8[%12, %c0_15] : memref<8x64xf32, #tpu.memory_space<vmem>>, vector<8x16xf32>
    %14 = arith.index_cast %11 : i32 to index
    %c0_16 = arith.constant 0 : index
    %15 = vector.load %arg9[%14, %c0_16] : memref<8x64xf32, #tpu.memory_space<vmem>>, vector<8x16xf32>
    %16 = arith.index_cast %11 : i32 to index
    %c0_17 = arith.constant 0 : index
    %17 = vector.load %arg10[%16, %c0_17] : memref<8x64xf32, #tpu.memory_space<vmem>>, vector<8x16xf32>
    "tpu.trace_start"() <{level = 10 : i32, message = "nd,md->nm"}> : () -> ()
    %cst_18 = arith.constant dense<0.000000e+00> : vector<8x8xf32>
    %18 = tpu.matmul %13, %15, %cst_18 {dimension_numbers = #tpu.dot_dimension_numbers<[1], [1], [0], [0], [0, 0, 1, 0], [], []>} : vector<8x16xf32>, vector<8x16xf32>, vector<8x8xf32> -> vector<8x8xf32>
    "tpu.trace_stop"() : () -> ()
    %cst_19 = arith.constant dense<0xFF800000> : vector<8xf32>
    %19 = vector.multi_reduction <maximumf>, %18, %cst_19 [1] : vector<8x8xf32> to vector<8xf32>
    %20 = vector.shape_cast %19 : vector<8xf32> to vector<8x1xf32>
    %21 = vector.broadcast %20 : vector<8x1xf32> to vector<8x8xf32>
    %22 = arith.subf %18, %21 : vector<8x8xf32>
    %23 = math.exp %22 : vector<8x8xf32>
    %cst_20 = arith.constant dense<0.000000e+00> : vector<8xf32>
    %24 = vector.multi_reduction <add>, %23, %cst_20 [1] : vector<8x8xf32> to vector<8xf32>
    %25 = vector.shape_cast %24 : vector<8xf32> to vector<8x1xf32>
    %26 = tpu.reciprocal %25 {approx = true} : vector<8x1xf32> -> vector<8x1xf32>
    %27 = vector.broadcast %26 : vector<8x1xf32> to vector<8x8xf32>
    %28 = arith.mulf %23, %27 : vector<8x8xf32>
    %cst_21 = arith.constant dense<0.000000e+00> : vector<8x16xf32>
    %29 = tpu.matmul %28, %17, %cst_21 {dimension_numbers = #tpu.dot_dimension_numbers<[1], [0], [0], [1], [0, 0, 1, 1], [], []>} : vector<8x8xf32>, vector<8x16xf32>, vector<8x16xf32> -> vector<8x16xf32>
    %30 = arith.index_cast %11 : i32 to index
    %c0_22 = arith.constant 0 : index
    %31 = vector.load %arg11[%30, %c0_22] : memref<8x64xf32, #tpu.memory_space<vmem>>, vector<8x16xf32>
    tpu.vector_store %arg11[%30, %c0_22], %29 {strides = array<i32>} : memref<8x64xf32, #tpu.memory_space<vmem>>, vector<8x16xf32>,
    %32 = arith.index_cast %11 : i32 to index
    %c16 = arith.constant 16 : index
    %33 = vector.load %arg8[%32, %c16] : memref<8x64xf32, #tpu.memory_space<vmem>>, vector<8x16xf32>
    %34 = arith.index_cast %11 : i32 to index
    %c16_23 = arith.constant 16 : index
    %35 = vector.load %arg9[%34, %c16_23] : memref<8x64xf32, #tpu.memory_space<vmem>>, vector<8x16xf32>
    %36 = arith.index_cast %11 : i32 to index
    %c16_24 = arith.constant 16 : index
    %37 = vector.load %arg10[%36, %c16_24] : memref<8x64xf32, #tpu.memory_space<vmem>>, vector<8x16xf32>
    "tpu.trace_start"() <{level = 10 : i32, message = "nd,md->nm"}> : () -> ()
    %cst_25 = arith.constant dense<0.000000e+00> : vector<8x8xf32>
    %38 = tpu.matmul %33, %35, %cst_25 {dimension_numbers = #tpu.dot_dimension_numbers<[1], [1], [0], [0], [0, 0, 1, 0], [], []>} : vector<8x16xf32>, vector<8x16xf32>, vector<8x8xf32> -> vector<8x8xf32>
    "tpu.trace_stop"() : () -> ()
    %cst_26 = arith.constant dense<0xFF800000> : vector<8xf32>
    %39 = vector.multi_reduction <maximumf>, %38, %cst_26 [1] : vector<8x8xf32> to vector<8xf32>
    %40 = vector.shape_cast %39 : vector<8xf32> to vector<8x1xf32>
    %41 = vector.broadcast %40 : vector<8x1xf32> to vector<8x8xf32>
    %42 = arith.subf %38, %41 : vector<8x8xf32>
    %43 = math.exp %42 : vector<8x8xf32>
    %cst_27 = arith.constant dense<0.000000e+00> : vector<8xf32>
    %44 = vector.multi_reduction <add>, %43, %cst_27 [1] : vector<8x8xf32> to vector<8xf32>
    %45 = vector.shape_cast %44 : vector<8xf32> to vector<8x1xf32>
    %46 = tpu.reciprocal %45 {approx = true} : vector<8x1xf32> -> vector<8x1xf32>
    %47 = vector.broadcast %46 : vector<8x1xf32> to vector<8x8xf32>
    %48 = arith.mulf %43, %47 : vector<8x8xf32>
    %cst_28 = arith.constant dense<0.000000e+00> : vector<8x16xf32>
    %49 = tpu.matmul %48, %37, %cst_28 {dimension_numbers = #tpu.dot_dimension_numbers<[1], [0], [0], [1], [0, 0, 1, 1], [], []>} : vector<8x8xf32>, vector<8x16xf32>, vector<8x16xf32> -> vector<8x16xf32>
    %50 = arith.index_cast %11 : i32 to index
    %c16_29 = arith.constant 16 : index
    %51 = vector.load %arg11[%50, %c16_29] : memref<8x64xf32, #tpu.memory_space<vmem>>, vector<8x16xf32>
    tpu.vector_store %arg11[%50, %c16_29], %49 {strides = array<i32>} : memref<8x64xf32, #tpu.memory_space<vmem>>, vector<8x16xf32>,
    %52 = arith.index_cast %11 : i32 to index
    %c32 = arith.constant 32 : index
    %53 = vector.load %arg8[%52, %c32] : memref<8x64xf32, #tpu.memory_space<vmem>>, vector<8x16xf32>
    %54 = arith.index_cast %11 : i32 to index
    %c32_30 = arith.constant 32 : index
    %55 = vector.load %arg9[%54, %c32_30] : memref<8x64xf32, #tpu.memory_space<vmem>>, vector<8x16xf32>
    %56 = arith.index_cast %11 : i32 to index
    %c32_31 = arith.constant 32 : index
    %57 = vector.load %arg10[%56, %c32_31] : memref<8x64xf32, #tpu.memory_space<vmem>>, vector<8x16xf32>
    "tpu.trace_start"() <{level = 10 : i32, message = "nd,md->nm"}> : () -> ()
    %cst_32 = arith.constant dense<0.000000e+00> : vector<8x8xf32>
    %58 = tpu.matmul %53, %55, %cst_32 {dimension_numbers = #tpu.dot_dimension_numbers<[1], [1], [0], [0], [0, 0, 1, 0], [], []>} : vector<8x16xf32>, vector<8x16xf32>, vector<8x8xf32> -> vector<8x8xf32>
    "tpu.trace_stop"() : () -> ()
    %cst_33 = arith.constant dense<0xFF800000> : vector<8xf32>
    %59 = vector.multi_reduction <maximumf>, %58, %cst_33 [1] : vector<8x8xf32> to vector<8xf32>
    %60 = vector.shape_cast %59 : vector<8xf32> to vector<8x1xf32>
    %61 = vector.broadcast %60 : vector<8x1xf32> to vector<8x8xf32>
    %62 = arith.subf %58, %61 : vector<8x8xf32>
    %63 = math.exp %62 : vector<8x8xf32>
    %cst_34 = arith.constant dense<0.000000e+00> : vector<8xf32>
    %64 = vector.multi_reduction <add>, %63, %cst_34 [1] : vector<8x8xf32> to vector<8xf32>
    %65 = vector.shape_cast %64 : vector<8xf32> to vector<8x1xf32>
    %66 = tpu.reciprocal %65 {approx = true} : vector<8x1xf32> -> vector<8x1xf32>
    %67 = vector.broadcast %66 : vector<8x1xf32> to vector<8x8xf32>
    %68 = arith.mulf %63, %67 : vector<8x8xf32>
    %cst_35 = arith.constant dense<0.000000e+00> : vector<8x16xf32>
    %69 = tpu.matmul %68, %57, %cst_35 {dimension_numbers = #tpu.dot_dimension_numbers<[1], [0], [0], [1], [0, 0, 1, 1], [], []>} : vector<8x8xf32>, vector<8x16xf32>, vector<8x16xf32> -> vector<8x16xf32>
    %70 = arith.index_cast %11 : i32 to index
    %c32_36 = arith.constant 32 : index
    %71 = vector.load %arg11[%70, %c32_36] : memref<8x64xf32, #tpu.memory_space<vmem>>, vector<8x16xf32>
    tpu.vector_store %arg11[%70, %c32_36], %69 {strides = array<i32>} : memref<8x64xf32, #tpu.memory_space<vmem>>, vector<8x16xf32>,
    %72 = arith.index_cast %11 : i32 to index
    %c48 = arith.constant 48 : index
    %73 = vector.load %arg8[%72, %c48] : memref<8x64xf32, #tpu.memory_space<vmem>>, vector<8x16xf32>
    %74 = arith.index_cast %11 : i32 to index
    %c48_37 = arith.constant 48 : index
    %75 = vector.load %arg9[%74, %c48_37] : memref<8x64xf32, #tpu.memory_space<vmem>>, vector<8x16xf32>
    %76 = arith.index_cast %11 : i32 to index
    %c48_38 = arith.constant 48 : index
    %77 = vector.load %arg10[%76, %c48_38] : memref<8x64xf32, #tpu.memory_space<vmem>>, vector<8x16xf32>
    "tpu.trace_start"() <{level = 10 : i32, message = "nd,md->nm"}> : () -> ()
    %cst_39 = arith.constant dense<0.000000e+00> : vector<8x8xf32>
    %78 = tpu.matmul %73, %75, %cst_39 {dimension_numbers = #tpu.dot_dimension_numbers<[1], [1], [0], [0], [0, 0, 1, 0], [], []>} : vector<8x16xf32>, vector<8x16xf32>, vector<8x8xf32> -> vector<8x8xf32>
    "tpu.trace_stop"() : () -> ()
    %cst_40 = arith.constant dense<0xFF800000> : vector<8xf32>
    %79 = vector.multi_reduction <maximumf>, %78, %cst_40 [1] : vector<8x8xf32> to vector<8xf32>
    %80 = vector.shape_cast %79 : vector<8xf32> to vector<8x1xf32>
    %81 = vector.broadcast %80 : vector<8x1xf32> to vector<8x8xf32>
    %82 = arith.subf %78, %81 : vector<8x8xf32>
    %83 = math.exp %82 : vector<8x8xf32>
    %cst_41 = arith.constant dense<0.000000e+00> : vector<8xf32>
    %84 = vector.multi_reduction <add>, %83, %cst_41 [1] : vector<8x8xf32> to vector<8xf32>
    %85 = vector.shape_cast %84 : vector<8xf32> to vector<8x1xf32>
    %86 = tpu.reciprocal %85 {approx = true} : vector<8x1xf32> -> vector<8x1xf32>
    %87 = vector.broadcast %86 : vector<8x1xf32> to vector<8x8xf32>
    %88 = arith.mulf %83, %87 : vector<8x8xf32>
    %cst_42 = arith.constant dense<0.000000e+00> : vector<8x16xf32>
    %89 = tpu.matmul %88, %77, %cst_42 {dimension_numbers = #tpu.dot_dimension_numbers<[1], [0], [0], [1], [0, 0, 1, 1], [], []>} : vector<8x8xf32>, vector<8x16xf32>, vector<8x16xf32> -> vector<8x16xf32>
    %90 = arith.index_cast %11 : i32 to index
    %c48_43 = arith.constant 48 : index
    %91 = vector.load %arg11[%90, %c48_43] : memref<8x64xf32, #tpu.memory_space<vmem>>, vector<8x16xf32>
    tpu.vector_store %arg11[%90, %c48_43], %89 {strides = array<i32>} : memref<8x64xf32, #tpu.memory_space<vmem>>, vector<8x16xf32>,
    %c1_i32 = arith.constant 1 : i32
    %c0_44 = arith.constant 0 : index
    %c0_45 = arith.constant 0 : index
    %92 = vector.load %arg11[%c0_44, %c0_45] : memref<8x64xf32, #tpu.memory_space<vmem>>, vector<8x64xf32>
    %c0_46 = arith.constant 0 : index
    %c0_47 = arith.constant 0 : index
    %93 = vector.load %arg5[%c0_46, %c0_47] : memref<64x32xf32, #tpu.memory_space<vmem>>, vector<64x32xf32>
    %cst_48 = arith.constant dense<0.000000e+00> : vector<8x32xf32>
    %94 = tpu.matmul %92, %93, %cst_48 {dimension_numbers = #tpu.dot_dimension_numbers<[1], [0], [0], [1], [0, 0, 1, 1], [], []>} : vector<8x64xf32>, vector<64x32xf32>, vector<8x32xf32> -> vector<8x32xf32>
    %c0_49 = arith.constant 0 : index
    %c0_50 = arith.constant 0 : index
    %95 = vector.load %arg6[%c0_49, %c0_50] : memref<1x32xf32, #tpu.memory_space<vmem>>, vector<1x32xf32>
    %96 = vector.broadcast %95 : vector<1x32xf32> to vector<8x32xf32>
    %97 = arith.addf %94, %96 : vector<8x32xf32>
    %c0_51 = arith.constant 0 : index
    %c0_52 = arith.constant 0 : index
    %98 = vector.load %arg7[%c0_51, %c0_52] : memref<8x32xf32, #tpu.memory_space<vmem>>, vector<8x32xf32>
    tpu.vector_store %arg7[%c0_51, %c0_52], %97 {strides = array<i32>} : memref<8x32xf32, #tpu.memory_space<vmem>>, vector<8x32xf32>,
    return
  }
  func.func @transform_0(%arg0: i32) -> (i32, i32) {
    %c0_i32 = arith.constant 0 : i32
    %c0_i32_0 = arith.constant 0 : i32
    return %arg0, %c0_i32 : i32, i32
  }
  func.func @transform_1(%arg0: i32) -> (i32, i32) {
    %c0_i32 = arith.constant 0 : i32
    %c0_i32_0 = arith.constant 0 : i32
    %c0_i32_1 = arith.constant 0 : i32
    return %c0_i32, %c0_i32_0 : i32, i32
  }
  func.func @transform_2(%arg0: i32) -> (i32, i32) {
    %c0_i32 = arith.constant 0 : i32
    %c0_i32_0 = arith.constant 0 : i32
    %c0_i32_1 = arith.constant 0 : i32
    return %c0_i32, %c0_i32_0 : i32, i32
  }
  func.func @transform_3(%arg0: i32) -> (i32, i32) {
    %c0_i32 = arith.constant 0 : i32
    %c0_i32_0 = arith.constant 0 : i32
    %c0_i32_1 = arith.constant 0 : i32
    return %c0_i32, %c0_i32_0 : i32, i32
  }
  func.func @transform_4(%arg0: i32) -> (i32, i32) {
    %c0_i32 = arith.constant 0 : i32
    %c0_i32_0 = arith.constant 0 : i32
    %c0_i32_1 = arith.constant 0 : i32
    return %c0_i32, %c0_i32_0 : i32, i32
  }
  func.func @transform_5(%arg0: i32) -> (i32, i32) {
    %c0_i32 = arith.constant 0 : i32
    %c0_i32_0 = arith.constant 0 : i32
    %c0_i32_1 = arith.constant 0 : i32
    return %c0_i32, %c0_i32_0 : i32, i32
  }
  func.func @transform_6(%arg0: i32) -> (i32, i32) {
    %c0_i32 = arith.constant 0 : i32
    %c0_i32_0 = arith.constant 0 : i32
    return %arg0, %c0_i32 : i32, i32
  }
}

</mosaic_0001>

<llo_original>
// kernel: tpu_custom_call.1
$region0: #{tpu_custom_call.1}
  #allocation0 [shape = 'u32[]', space=smem, size = 0x4, offset = 0x4, fixed_abs, tag = 'smem constant byte address 0x4 - core index']
  #allocation1 [shape = 'u32[72,128]{1,0:T(1,128)}', space=vmem, size = 0x9000, scoped, tag = 'internal scratch']
  #allocation2 [shape = 'f32[8,64]{1,0:T(8,128)}', space=vmem, size = 0x1000, scoped, tag = 'scratch operand']
  #allocation3 [shape = 'f32[8,64]{1,0:T(8,128)}', space=vmem, size = 0x1000, scoped, tag = 'scratch operand']
  #allocation4 [shape = 'f32[8,64]{1,0:T(8,128)}', space=vmem, size = 0x1000, scoped, tag = 'scratch operand']
  #allocation5 [shape = 'f32[8,64]{1,0:T(8,128)}', space=vmem, size = 0x1000, scoped, tag = 'scratch operand']
  %s0 = inlined_call_operand.hbm [shape: f32[16,32], index: 0, kind: input, shape index: {}]
  %s1 = inlined_call_operand.vmem [shape: f32[32,64], index: 1, kind: input, shape index: {}]
  %s2 = inlined_call_operand.vmem [shape: f32[32,64], index: 2, kind: input, shape index: {}]
  %s3 = inlined_call_operand.vmem [shape: f32[32,64], index: 3, kind: input, shape index: {}]
  %s4 = inlined_call_operand.vmem [shape: f32[64,32], index: 4, kind: input, shape index: {}]
  %s5 = inlined_call_operand.vmem [shape: f32[1,32], index: 5, kind: input, shape index: {}]
  %s6 = inlined_call_operand.hbm [shape: f32[16,32], index: 6, kind: output, shape index: {}]
  %s7 = sld [smem:[#allocation0]]
  $region61: #{tpu_custom_call.1} parent=0
    _
  %s9 = ssub.s32 1, %s7
  %s10 = scalar_select 0, %s9, %s7
  $region1: #{tpu_custom_call.1} parent=0
    #allocation6 [shape = 'u8[8192]{0}', space=vmem, size = 0x2000, scoped, tag = 'input window, operand 0']
    #allocation7 [shape = 's32[2]{0}', space=sflag, size = 0x8, scoped, tag = 'scoped memory for tpu_custom_call.1']
    #allocation8 [shape = 's32[2]{0}', space=sflag, size = 0x8, scoped, tag = 'scoped memory for tpu_custom_call.1']
    #allocation9 [shape = 'u8[8192]{0}', space=vmem, size = 0x2000, scoped, tag = 'output window, operand 0']
    %11 = vsyncpa [#allocation7], 0
    %s12 = scalar_lea.sflag [#allocation7], 1
    %13 = vsyncpa %s12, 0
    %14 = vsyncpa [#allocation8], 0
    %s15 = scalar_lea.sflag [#allocation8], 1
    %16 = vsyncpa %s15, 0
    loop: start=0, step=1, limit=4
    $region2: #{tpu_custom_call.1} parent=1 // loop_pre_header
      _
    $region3: #{tpu_custom_call.1} parent=1 // loop_header
      %s18 = sphi 0, %s22
      %p19 = scmp.ge.s32.totalorder %s18, 4
      %s28 = sphi 0, %s30
      %s31 = sphi 0, %s28
      %s32 = sphi 0, %s31
      %s48 = sphi 0, %s32
      %s52 = sphi 0, %s52
      %s54 = sphi 0, %s52
      %s55 = sphi 0, %s54
      %s69 = sphi 0, %s55
      %s73 = sphi 0, %s73
      %s75 = sphi 0, %s73
      %s76 = sphi 0, %s75
      %s90 = sphi 0, %s76
      %s94 = sphi 0, %s94
      %s96 = sphi 0, %s94
      %s97 = sphi 0, %s96
      %s111 = sphi 0, %s97
      %s115 = sphi 0, %s115
      %s117 = sphi 0, %s115
      %s118 = sphi 0, %s117
      %s132 = sphi 0, %s118
      %s136 = sphi 0, %s136
      %s138 = sphi 0, %s136
      %s139 = sphi 0, %s138
      %s153 = sphi 0, %s139
      %s159 = sphi 0, %s161
      %s162 = sphi 0, %s159
      %s163 = sphi 0, %s162
      %s179 = sphi 0, %s163
    $region4: #{tpu_custom_call.1} parent=1 // loop_header_branch
      %21 = sbr.rel (%p19) target = $region8
    $region5: #{tpu_custom_call.1} parent=1 // loop_body
      %s23 = ssub.s32 %s18, 1
      %s24 = ssub.s32 %s18, 2
      %s25 = sadd.s32 %s18, 1
      %s26 = ssub.s32 %s18, %s25
      %p27 = scmp.eq.s32.totalorder %s26, 0
      %s29 = sadd.s32 %s28, 1
      %s30 = scalar_select %p27, %s28, %s29
      %p33 = pneg %p27
      %p34 = scmp.eq.s32.totalorder %s18, 1
      %p35 = por %p33, %p34
      %p36 = scmp.ne.s32.totalorder %s28, %s31
      %p37 = scmp.eq.s32.totalorder %s18, 0
      %p38 = por %p36, %p37
      %p39 = scmp.ne.s32.totalorder %s28, %s31
      %p40 = scmp.eq.s32.totalorder %s23, 1
      %p41 = por %p39, %p40
      %p42 = scmp.ne.s32.totalorder %s31, %s32
      %p43 = scmp.eq.s32.totalorder %s23, 0
      %p44 = por %p42, %p43
      %p45 = scmp.ne.s32.totalorder %s31, %s32
      %p46 = scmp.eq.s32.totalorder %s24, 1
      %p47 = por %p45, %p46
      %p49 = scmp.ne.s32.totalorder %s32, %s48
      %p50 = scmp.eq.s32.totalorder %s24, 0
      %p51 = por %p49, %p50
      %s53 = sadd.s32 %s52, 1
      %p56 = scmp.eq.s32.totalorder %s18, 1
      %p57 = scmp.ne.s32.totalorder %s52, %s54
      %p58 = scmp.eq.s32.totalorder %s18, 0
      %p59 = por %p57, %p58
      %p60 = scmp.ne.s32.totalorder %s52, %s54
      %p61 = scmp.eq.s32.totalorder %s23, 1
      %p62 = por %p60, %p61
      %p63 = scmp.ne.s32.totalorder %s54, %s55
      %p64 = scmp.eq.s32.totalorder %s23, 0
      %p65 = por %p63, %p64
      %p66 = scmp.ne.s32.totalorder %s54, %s55
      %p67 = scmp.eq.s32.totalorder %s24, 1
      %p68 = por %p66, %p67
      %p70 = scmp.ne.s32.totalorder %s55, %s69
      %p71 = scmp.eq.s32.totalorder %s24, 0
      %p72 = por %p70, %p71
      %s74 = sadd.s32 %s73, 1
      %p77 = scmp.eq.s32.totalorder %s18, 1
      %p78 = scmp.ne.s32.totalorder %s73, %s75
      %p79 = scmp.eq.s32.totalorder %s18, 0
      %p80 = por %p78, %p79
      %p81 = scmp.ne.s32.totalorder %s73, %s75
      %p82 = scmp.eq.s32.totalorder %s23, 1
      %p83 = por %p81, %p82
      %p84 = scmp.ne.s32.totalorder %s75, %s76
      %p85 = scmp.eq.s32.totalorder %s23, 0
      %p86 = por %p84, %p85
      %p87 = scmp.ne.s32.totalorder %s75, %s76
      %p88 = scmp.eq.s32.totalorder %s24, 1
      %p89 = por %p87, %p88
      %p91 = scmp.ne.s32.totalorder %s76, %s90
      %p92 = scmp.eq.s32.totalorder %s24, 0
      %p93 = por %p91, %p92
      %s95 = sadd.s32 %s94, 1
      %p98 = scmp.eq.s32.totalorder %s18, 1
      %p99 = scmp.ne.s32.totalorder %s94, %s96
      %p100 = scmp.eq.s32.totalorder %s18, 0
      %p101 = por %p99, %p100
      %p102 = scmp.ne.s32.totalorder %s94, %s96
      %p103 = scmp.eq.s32.totalorder %s23, 1
      %p104 = por %p102, %p103
      %p105 = scmp.ne.s32.totalorder %s96, %s97
      %p106 = scmp.eq.s32.totalorder %s23, 0
      %p107 = por %p105, %p106
      %p108 = scmp.ne.s32.totalorder %s96, %s97
      %p109 = scmp.eq.s32.totalorder %s24, 1
      %p110 = por %p108, %p109
      %p112 = scmp.ne.s32.totalorder %s97, %s111
      %p113 = scmp.eq.s32.totalorder %s24, 0
      %p114 = por %p112, %p113
      %s116 = sadd.s32 %s115, 1
      %p119 = scmp.eq.s32.totalorder %s18, 1
      %p120 = scmp.ne.s32.totalorder %s115, %s117
      %p121 = scmp.eq.s32.totalorder %s18, 0
      %p122 = por %p120, %p121
      %p123 = scmp.ne.s32.totalorder %s115, %s117
      %p124 = scmp.eq.s32.totalorder %s23, 1
      %p125 = por %p123, %p124
      %p126 = scmp.ne.s32.totalorder %s117, %s118
      %p127 = scmp.eq.s32.totalorder %s23, 0
      %p128 = por %p126, %p127
      %p129 = scmp.ne.s32.totalorder %s117, %s118
      %p130 = scmp.eq.s32.totalorder %s24, 1
      %p131 = por %p129, %p130
      %p133 = scmp.ne.s32.totalorder %s118, %s132
      %p134 = scmp.eq.s32.totalorder %s24, 0
      %p135 = por %p133, %p134
      %s137 = sadd.s32 %s136, 1
      %p140 = scmp.eq.s32.totalorder %s18, 1
      %p141 = scmp.ne.s32.totalorder %s136, %s138
      %p142 = scmp.eq.s32.totalorder %s18, 0
      %p143 = por %p141, %p142
      %p144 = scmp.ne.s32.totalorder %s136, %s138
      %p145 = scmp.eq.s32.totalorder %s23, 1
      %p146 = por %p144, %p145
      %p147 = scmp.ne.s32.totalorder %s138, %s139
      %p148 = scmp.eq.s32.totalorder %s23, 0
      %p149 = por %p147, %p148
      %p150 = scmp.ne.s32.totalorder %s138, %s139
      %p151 = scmp.eq.s32.totalorder %s24, 1
      %p152 = por %p150, %p151
      %p154 = scmp.ne.s32.totalorder %s139, %s153
      %p155 = scmp.eq.s32.totalorder %s24, 0
      %p156 = por %p154, %p155
      %s157 = ssub.s32 %s18, %s25
      %p158 = scmp.eq.s32.totalorder %s157, 0
      %s160 = sadd.s32 %s159, 1
      %s161 = scalar_select %p158, %s159, %s160
      %p164 = pneg %p158
      %p165 = scmp.eq.s32.totalorder %s18, 1
      %p166 = por %p164, %p165
      %p167 = scmp.ne.s32.totalorder %s159, %s162
      %p168 = scmp.eq.s32.totalorder %s18, 0
      %p169 = por %p167, %p168
      %p170 = scmp.ne.s32.totalorder %s159, %s162
      %p171 = scmp.eq.s32.totalorder %s23, 1
      %p172 = por %p170, %p171
      %p173 = scmp.ne.s32.totalorder %s162, %s163
      %p174 = scmp.eq.s32.totalorder %s23, 0
      %p175 = por %p173, %p174
      %p176 = scmp.ne.s32.totalorder %s162, %s163
      %p177 = scmp.eq.s32.totalorder %s24, 1
      %p178 = por %p176, %p177
      %p180 = scmp.ne.s32.totalorder %s163, %s179
      %p181 = scmp.eq.s32.totalorder %s24, 0
      %p182 = por %p180, %p181
      %p183 = scmp.le.s32.totalorder 1, %s18
      %p184 = scmp.lt.s32.totalorder %s18, 3
      %p185 = pnand %p183, %p184
      %p186 = pneg %p185
      // Predicated region
      $region9: #{tpu_custom_call.1} parent=5 // pred_check
        _
      $region10: #{tpu_custom_call.1} parent=5 // pred_check_branch
        %188 = sbr.rel (%p185) target = $region12
      $region11: #{tpu_custom_call.1} parent=5 // pred_region
        %s189 = ssub.s32 %s18, 1
        // Predicated region
        $region13: #{tpu_custom_call.1} parent=11 // pred_check
          %p190 = pneg %p65
        $region14: #{tpu_custom_call.1} parent=11 // pred_check_branch
          %192 = sbr.rel (%p190) target = $region16
        $region15: #{tpu_custom_call.1} parent=11 // pred_region
          _
        $region16: #{tpu_custom_call.1} parent=11 // pred_fallthru
          _
        // Predicated region
        $region17: #{tpu_custom_call.1} parent=11 // pred_check
          %p193 = pneg %p86
        $region18: #{tpu_custom_call.1} parent=11 // pred_check_branch
          %195 = sbr.rel (%p193) target = $region20
        $region19: #{tpu_custom_call.1} parent=11 // pred_region
          _
        $region20: #{tpu_custom_call.1} parent=11 // pred_fallthru
          _
        // Predicated region
        $region21: #{tpu_custom_call.1} parent=11 // pred_check
          %p196 = pneg %p107
        $region22: #{tpu_custom_call.1} parent=11 // pred_check_branch
          %198 = sbr.rel (%p196) target = $region24
        $region23: #{tpu_custom_call.1} parent=11 // pred_region
          _
        $region24: #{tpu_custom_call.1} parent=11 // pred_fallthru
          _
        // Predicated region
        $region25: #{tpu_custom_call.1} parent=11 // pred_check
          %p199 = pneg %p128
        $region26: #{tpu_custom_call.1} parent=11 // pred_check_branch
          %201 = sbr.rel (%p199) target = $region28
        $region27: #{tpu_custom_call.1} parent=11 // pred_region
          _
        $region28: #{tpu_custom_call.1} parent=11 // pred_fallthru
          _
        // Predicated region
        $region29: #{tpu_custom_call.1} parent=11 // pred_check
          %p202 = pneg %p149
        $region30: #{tpu_custom_call.1} parent=11 // pred_check_branch
          %204 = sbr.rel (%p202) target = $region32
        $region31: #{tpu_custom_call.1} parent=11 // pred_region
          _
        $region32: #{tpu_custom_call.1} parent=11 // pred_fallthru
          _
      $region12: #{tpu_custom_call.1} parent=5 // pred_fallthru
        _
      %p205 = scmp.lt.s32.totalorder %s18, 2
      // Predicated region
      $region33: #{tpu_custom_call.1} parent=5 // pred_check
        %p206 = pneg %p205
      $region34: #{tpu_custom_call.1} parent=5 // pred_check_branch
        %208 = sbr.rel (%p206) target = $region36
      $region35: #{tpu_custom_call.1} parent=5 // pred_region
        // Predicated region
        $region37: #{tpu_custom_call.1} parent=35 // pred_check
          %p209 = pneg %p38
        $region38: #{tpu_custom_call.1} parent=35 // pred_check_branch
          %211 = sbr.rel (%p209) target = $region40
        $region39: #{tpu_custom_call.1} parent=35 // pred_region
          %s212 = sand.u32 %s28, 1
          %s213 = scalar_lea.sflag [#allocation7], %s212
          %s214 = sand.u32 %s28, 1
          %s215 = smul.addr %s214, 8
          %s216 = scalar_lea.vmem [#allocation6], %s215
          %218 = vsyncadd %s213, 0
          %s219 = smul.addr %s18, 8
          %s220 = scalar_lea.hbm %s0, %s219
          %s222 = sshll.u32 %s220, 4
          %s223 = int_to_ptr.hbm [resolvable:$true] %s222
          %s224 = sshll.u32 %s216, 4
          %s225 = int_to_ptr.vmem [resolvable:$true] %s224
          %227 = dma.hbm_to_vmem [thread:$0]  %s223, 128, %s225, %s213
        $region40: #{tpu_custom_call.1} parent=35 // pred_fallthru
          _
      $region36: #{tpu_custom_call.1} parent=5 // pred_fallthru
        _
      %p228 = scmp.le.s32.totalorder 1, %s18
      %p229 = scmp.lt.s32.totalorder %s18, 3
      %p230 = pnand %p228, %p229
      %p231 = pneg %p230
      // Predicated region
      $region41: #{tpu_custom_call.1} parent=5 // pred_check
        _
      $region42: #{tpu_custom_call.1} parent=5 // pred_check_branch
        %233 = sbr.rel (%p230) target = $region44
      $region43: #{tpu_custom_call.1} parent=5 // pred_region
        %s234 = ssub.s32 %s18, 1
        %s235 = sand.u32 %s31, 1
        %s236 = scalar_lea.sflag [#allocation7], %s235
        %s237 = sand.u32 %s31, 1
        %s238 = smul.addr %s237, 8
        %s239 = scalar_lea.vmem [#allocation6], %s238
        // Predicated region
        $region45: #{tpu_custom_call.1} parent=43 // pred_check
          %p240 = pneg %p44
        $region46: #{tpu_custom_call.1} parent=43 // pred_check_branch
          %242 = sbr.rel (%p240) target = $region48
        $region47: #{tpu_custom_call.1} parent=43 // pred_region
          %244 = dma.done %s236, 128
        $region48: #{tpu_custom_call.1} parent=43 // pred_fallthru
          _
        %s245 = sand.u32 %s31, 1
        %s246 = scalar_lea.sflag [#allocation7], %s245
        %s247 = sand.u32 %s31, 1
        %s248 = smul.addr %s247, 8
        %s249 = scalar_lea.vmem [#allocation6], %s248
        %p250 = pneg %p44
        %p251 = pneg %p41
        %p252 = pneg %p65
        %p253 = pneg %p62
        %p254 = pneg %p86
        %p255 = pneg %p83
        %p256 = pneg %p107
        %p257 = pneg %p104
        %p258 = pneg %p128
        %p259 = pneg %p125
        %p260 = pneg %p149
        %p261 = pneg %p146
        %p262 = pneg %p175
        %p263 = pneg %p172
        %s264 = sand.u32 %s162, 1
        %s265 = scalar_lea.sflag [#allocation8], %s264
        %s266 = sand.u32 %s162, 1
        %s267 = smul.addr %s266, 8
        %s268 = scalar_lea.vmem [#allocation9], %s267
        %v269 = vld [vmem:[%s239] sm:$0xff]
        %v270 = vld [vmem:[%s1] sm:$0xff]
        %v271 = vld [vmem:[%s1 + $0x8] sm:$0xff]
        %v272 = vld [vmem:[%s1 + $0x10] sm:$0xff]
        %v273 = vld [vmem:[%s1 + $0x18] sm:$0xff]
        %vm274 = vcmask 261120
        %v276 = vsel %vm274, %v269, 0
        %278 = vmatpush.msra.mxu0 0.0
        %279 = vmatpush.msra.mxu0 0.0
        %280 = vmatpush.msra.mxu0 0.0
        %281 = vmatpush.msra.mxu0 0.0
        %282 = vmatpush.msra.mxu0 0.0
        %283 = vmatpush.msra.mxu0 0.0
        %284 = vmatpush.msra.mxu0 0.0
        %285 = vmatpush.msra.mxu0 0.0
        %286 = vmatpush.msra.mxu0 0.0
        %287 = vmatpush.msra.mxu0 0.0
        %288 = vmatpush.msra.mxu0 0.0
        %289 = vmatpush.msra.mxu0 0.0
        %290 = vmatpush.msra.mxu0 %v273
        %291 = vmatpush.msra.mxu0 %v272
        %292 = vmatpush.msra.mxu0 %v271
        %293 = vmatpush.msra.mxu0 %v270
        %294 = vmatmul.f32.gmra.mxu0 %v276
        %v295 = vpop.f32.mrf.mxu0
        %v296 = vadd.f32 0.0, %v295
        %297 = vdwg.mxu0
        %vm298 = vcmask 523264
        %299 = vst.msk [vmem:[#allocation2] sm:$0xff] %vm298, %v296
        %v300 = vld [vmem:[%s2] sm:$0xff]
        %v301 = vld [vmem:[%s2 + $0x8] sm:$0xff]
        %v302 = vld [vmem:[%s2 + $0x10] sm:$0xff]
        %v303 = vld [vmem:[%s2 + $0x18] sm:$0xff]
        %304 = vmatpush.msra.mxu0 0.0
        %305 = vmatpush.msra.mxu0 0.0
        %306 = vmatpush.msra.mxu0 0.0
        %307 = vmatpush.msra.mxu0 0.0
        %308 = vmatpush.msra.mxu0 0.0
        %309 = vmatpush.msra.mxu0 0.0
        %310 = vmatpush.msra.mxu0 0.0
        %311 = vmatpush.msra.mxu0 0.0
        %312 = vmatpush.msra.mxu0 0.0
        %313 = vmatpush.msra.mxu0 0.0
        %314 = vmatpush.msra.mxu0 0.0
        %315 = vmatpush.msra.mxu0 0.0
        %316 = vmatpush.msra.mxu0 %v303
        %317 = vmatpush.msra.mxu0 %v302
        %318 = vmatpush.msra.mxu0 %v301
        %319 = vmatpush.msra.mxu0 %v300
        %320 = vmatmul.f32.gmra.mxu0 %v276
        %v321 = vpop.f32.mrf.mxu0
        %v322 = vadd.f32 0.0, %v321
        %323 = vdwg.mxu0
        %324 = vst.msk [vmem:[#allocation3] sm:$0xff] %vm298, %v322
        %v325 = vld [vmem:[%s3] sm:$0xff]
        %v326 = vld [vmem:[%s3 + $0x8] sm:$0xff]
        %v327 = vld [vmem:[%s3 + $0x10] sm:$0xff]
        %v328 = vld [vmem:[%s3 + $0x18] sm:$0xff]
        %329 = vmatpush.msra.mxu0 0.0
        %330 = vmatpush.msra.mxu0 0.0
        %331 = vmatpush.msra.mxu0 0.0
        %332 = vmatpush.msra.mxu0 0.0
        %333 = vmatpush.msra.mxu0 0.0
        %334 = vmatpush.msra.mxu0 0.0
        %335 = vmatpush.msra.mxu0 0.0
        %336 = vmatpush.msra.mxu0 0.0
        %337 = vmatpush.msra.mxu0 0.0
        %338 = vmatpush.msra.mxu0 0.0
        %339 = vmatpush.msra.mxu0 0.0
        %340 = vmatpush.msra.mxu0 0.0
        %341 = vmatpush.msra.mxu0 %v328
        %342 = vmatpush.msra.mxu0 %v327
        %343 = vmatpush.msra.mxu0 %v326
        %344 = vmatpush.msra.mxu0 %v325
        %345 = vmatmul.f32.gmra.mxu0 %v276
        %v346 = vpop.f32.mrf.mxu0
        %v347 = vadd.f32 0.0, %v346
        %348 = vdwg.mxu0
        %349 = vst.msk [vmem:[#allocation4] sm:$0xff] %vm298, %v347
        %v350 = vld [vmem:[#allocation2] sm:$0xff]
        %v351 = vld [vmem:[#allocation3] sm:$0xff]
        %v352 = vld [vmem:[#allocation4] sm:$0xff]
        %vm353 = vcmask 130048
        %v355 = vsel %vm353, %v350, 0
        %v358 = vsel %vm353, %v351, 0
        %360 = vmatpush.xpose.msra.mxu0 0.0
        %361 = vmatpush.xpose.msra.mxu0 0.0
        %362 = vmatpush.xpose.msra.mxu0 0.0
        %363 = vmatpush.xpose.msra.mxu0 0.0
        %364 = vmatpush.xpose.msra.mxu0 0.0
        %365 = vmatpush.xpose.msra.mxu0 0.0
        %366 = vmatpush.xpose.msra.mxu0 0.0
        %367 = vmatpush.xpose.msra.mxu0 0.0
        %368 = vmatpush.xpose.msra.mxu0 0.0
        %369 = vmatpush.xpose.msra.mxu0 0.0
        %370 = vmatpush.xpose.msra.mxu0 0.0
        %371 = vmatpush.xpose.msra.mxu0 0.0
        %372 = vmatpush.xpose.msra.mxu0 0.0
        %373 = vmatpush.xpose.msra.mxu0 0.0
        %374 = vmatpush.xpose.msra.mxu0 0.0
        %375 = vmatpush.xpose.msra.mxu0 %v358
        %376 = vmatmul.f32.gmra.mxu0 %v355
        %v377 = vpop.f32.mrf.mxu0
        %v378 = vadd.f32 0.0, %v377
        %379 = vdwg.mxu0
        %vm380 = vcmask 64512
        %v381 = vsel %vm380, %v378, -inf
        %382 = vmax.xlane.f32.xlu0 %v381
        %v383 = vpop.xlane.xlu0 %382
        %v384 = vsub.f32 %v378, %v383
        %v385 = vmul.f32 %v384, 1.442695
        %v386 = vpow.pop %v385
        %v387 = vsel %vm380, %v386, 0.0
        %388 = vadd.xlane.f32.xlu0 %v387
        %v389 = vpop.xlane.xlu0 %388
        %v390 = vrcp.pop %v389
        %v391 = vmul.f32 %v386, %v390
        %v393 = vsel %vm380, %v391, 0
        %395 = vmatpush.msra.mxu0 0.0
        %396 = vmatpush.msra.mxu0 0.0
        %397 = vmatpush.msra.mxu0 0.0
        %398 = vmatpush.msra.mxu0 0.0
        %399 = vmatpush.msra.mxu0 0.0
        %400 = vmatpush.msra.mxu0 0.0
        %401 = vmatpush.msra.mxu0 0.0
        %402 = vmatpush.msra.mxu0 0.0
        %403 = vmatpush.msra.mxu0 0.0
        %404 = vmatpush.msra.mxu0 0.0
        %405 = vmatpush.msra.mxu0 0.0
        %406 = vmatpush.msra.mxu0 0.0
        %407 = vmatpush.msra.mxu0 0.0
        %408 = vmatpush.msra.mxu0 0.0
        %409 = vmatpush.msra.mxu0 0.0
        %410 = vmatpush.msra.mxu0 %v352
        %411 = vmatmul.f32.gmra.mxu0 %v393
        %v412 = vpop.f32.mrf.mxu0
        %v413 = vadd.f32 0.0, %v412
        %414 = vdwg.mxu0
        %415 = vst.msk [vmem:[#allocation5] sm:$0xff] %vm353, %v413
        %v416 = vld [vmem:[#allocation2] sm:$0xff]
        %v417 = vld [vmem:[#allocation3] sm:$0xff]
        %v418 = vld [vmem:[#allocation4] sm:$0xff]
        %420 = vrot.lane.b32.xlu0 %v416, 112
        %v421 = vpop.permute.xlu0 %420
        %423 = vrot.lane.b32.xlu0 %v417, 112
        %v424 = vpop.permute.xlu0 %423
        %v425 = vsel %vm353, %v421, 0
        %v427 = vsel %vm353, %v424, 0
        %429 = vmatpush.xpose.msra.mxu0 0.0
        %430 = vmatpush.xpose.msra.mxu0 0.0
        %431 = vmatpush.xpose.msra.mxu0 0.0
        %432 = vmatpush.xpose.msra.mxu0 0.0
        %433 = vmatpush.xpose.msra.mxu0 0.0
        %434 = vmatpush.xpose.msra.mxu0 0.0
        %435 = vmatpush.xpose.msra.mxu0 0.0
        %436 = vmatpush.xpose.msra.mxu0 0.0
        %437 = vmatpush.xpose.msra.mxu0 0.0
        %438 = vmatpush.xpose.msra.mxu0 0.0
        %439 = vmatpush.xpose.msra.mxu0 0.0
        %440 = vmatpush.xpose.msra.mxu0 0.0
        %441 = vmatpush.xpose.msra.mxu0 0.0
        %442 = vmatpush.xpose.msra.mxu0 0.0
        %443 = vmatpush.xpose.msra.mxu0 0.0
        %444 = vmatpush.xpose.msra.mxu0 %v427
        %445 = vmatmul.f32.gmra.mxu0 %v425
        %v446 = vpop.f32.mrf.mxu0
        %v447 = vadd.f32 0.0, %v446
        %448 = vdwg.mxu0
        %v449 = vsel %vm380, %v447, -inf
        %450 = vmax.xlane.f32.xlu0 %v449
        %v451 = vpop.xlane.xlu0 %450
        %v452 = vsub.f32 %v447, %v451
        %v453 = vmul.f32 %v452, 1.442695
        %v454 = vpow.pop %v453
        %v455 = vsel %vm380, %v454, 0.0
        %456 = vadd.xlane.f32.xlu0 %v455
        %v457 = vpop.xlane.xlu0 %456
        %v458 = vrcp.pop %v457
        %v459 = vmul.f32 %v454, %v458
        %461 = vrot.lane.b32.xlu0 %v418, 112
        %v462 = vpop.permute.xlu0 %461
        %v465 = vsel %vm380, %v459, 0
        %467 = vmatpush.msra.mxu0 0.0
        %468 = vmatpush.msra.mxu0 0.0
        %469 = vmatpush.msra.mxu0 0.0
        %470 = vmatpush.msra.mxu0 0.0
        %471 = vmatpush.msra.mxu0 0.0
        %472 = vmatpush.msra.mxu0 0.0
        %473 = vmatpush.msra.mxu0 0.0
        %474 = vmatpush.msra.mxu0 0.0
        %475 = vmatpush.msra.mxu0 0.0
        %476 = vmatpush.msra.mxu0 0.0
        %477 = vmatpush.msra.mxu0 0.0
        %478 = vmatpush.msra.mxu0 0.0
        %479 = vmatpush.msra.mxu0 0.0
        %480 = vmatpush.msra.mxu0 0.0
        %481 = vmatpush.msra.mxu0 0.0
        %482 = vmatpush.msra.mxu0 %v462
        %483 = vmatmul.f32.gmra.mxu0 %v465
        %v484 = vpop.f32.mrf.mxu0
        %v485 = vadd.f32 0.0, %v484
        %486 = vdwg.mxu0
        %488 = vrot.lane.b32.xlu0 %v485, 16
        %v489 = vpop.permute.xlu0 %488
        %vm491 = vcmask 261248
        %492 = vst.msk [vmem:[#allocation5] sm:$0xff] %vm491, %v489
        %v493 = vld [vmem:[#allocation2] sm:$0xff]
        %v494 = vld [vmem:[#allocation3] sm:$0xff]
        %v495 = vld [vmem:[#allocation4] sm:$0xff]
        %497 = vrot.lane.b32.xlu0 %v493, 96
        %v498 = vpop.permute.xlu0 %497
        %500 = vrot.lane.b32.xlu0 %v494, 96
        %v501 = vpop.permute.xlu0 %500
        %v502 = vsel %vm353, %v498, 0
        %v504 = vsel %vm353, %v501, 0
        %506 = vmatpush.xpose.msra.mxu0 0.0
        %507 = vmatpush.xpose.msra.mxu0 0.0
        %508 = vmatpush.xpose.msra.mxu0 0.0
        %509 = vmatpush.xpose.msra.mxu0 0.0
        %510 = vmatpush.xpose.msra.mxu0 0.0
        %511 = vmatpush.xpose.msra.mxu0 0.0
        %512 = vmatpush.xpose.msra.mxu0 0.0
        %513 = vmatpush.xpose.msra.mxu0 0.0
        %514 = vmatpush.xpose.msra.mxu0 0.0
        %515 = vmatpush.xpose.msra.mxu0 0.0
        %516 = vmatpush.xpose.msra.mxu0 0.0
        %517 = vmatpush.xpose.msra.mxu0 0.0
        %518 = vmatpush.xpose.msra.mxu0 0.0
        %519 = vmatpush.xpose.msra.mxu0 0.0
        %520 = vmatpush.xpose.msra.mxu0 0.0
        %521 = vmatpush.xpose.msra.mxu0 %v504
        %522 = vmatmul.f32.gmra.mxu0 %v502
        %v523 = vpop.f32.mrf.mxu0
        %v524 = vadd.f32 0.0, %v523
        %525 = vdwg.mxu0
        %v526 = vsel %vm380, %v524, -inf
        %527 = vmax.xlane.f32.xlu0 %v526
        %v528 = vpop.xlane.xlu0 %527
        %v529 = vsub.f32 %v524, %v528
        %v530 = vmul.f32 %v529, 1.442695
        %v531 = vpow.pop %v530
        %v532 = vsel %vm380, %v531, 0.0
        %533 = vadd.xlane.f32.xlu0 %v532
        %v534 = vpop.xlane.xlu0 %533
        %v535 = vrcp.pop %v534
        %v536 = vmul.f32 %v531, %v535
        %538 = vrot.lane.b32.xlu0 %v495, 96
        %v539 = vpop.permute.xlu0 %538
        %v542 = vsel %vm380, %v536, 0
        %544 = vmatpush.msra.mxu0 0.0
        %545 = vmatpush.msra.mxu0 0.0
        %546 = vmatpush.msra.mxu0 0.0
        %547 = vmatpush.msra.mxu0 0.0
        %548 = vmatpush.msra.mxu0 0.0
        %549 = vmatpush.msra.mxu0 0.0
        %550 = vmatpush.msra.mxu0 0.0
        %551 = vmatpush.msra.mxu0 0.0
        %552 = vmatpush.msra.mxu0 0.0
        %553 = vmatpush.msra.mxu0 0.0
        %554 = vmatpush.msra.mxu0 0.0
        %555 = vmatpush.msra.mxu0 0.0
        %556 = vmatpush.msra.mxu0 0.0
        %557 = vmatpush.msra.mxu0 0.0
        %558 = vmatpush.msra.mxu0 0.0
        %559 = vmatpush.msra.mxu0 %v539
        %560 = vmatmul.f32.gmra.mxu0 %v542
        %v561 = vpop.f32.mrf.mxu0
        %v562 = vadd.f32 0.0, %v561
        %563 = vdwg.mxu0
        %565 = vrot.lane.b32.xlu0 %v562, 32
        %v566 = vpop.permute.xlu0 %565
        %vm568 = vcmask 392448
        %569 = vst.msk [vmem:[#allocation5] sm:$0xff] %vm568, %v566
        %v570 = vld [vmem:[#allocation2] sm:$0xff]
        %v571 = vld [vmem:[#allocation3] sm:$0xff]
        %v572 = vld [vmem:[#allocation4] sm:$0xff]
        %574 = vrot.lane.b32.xlu0 %v570, 80
        %v575 = vpop.permute.xlu0 %574
        %577 = vrot.lane.b32.xlu0 %v571, 80
        %v578 = vpop.permute.xlu0 %577
        %v579 = vsel %vm353, %v575, 0
        %v581 = vsel %vm353, %v578, 0
        %583 = vmatpush.xpose.msra.mxu0 0.0
        %584 = vmatpush.xpose.msra.mxu0 0.0
        %585 = vmatpush.xpose.msra.mxu0 0.0
        %586 = vmatpush.xpose.msra.mxu0 0.0
        %587 = vmatpush.xpose.msra.mxu0 0.0
        %588 = vmatpush.xpose.msra.mxu0 0.0
        %589 = vmatpush.xpose.msra.mxu0 0.0
        %590 = vmatpush.xpose.msra.mxu0 0.0
        %591 = vmatpush.xpose.msra.mxu0 0.0
        %592 = vmatpush.xpose.msra.mxu0 0.0
        %593 = vmatpush.xpose.msra.mxu0 0.0
        %594 = vmatpush.xpose.msra.mxu0 0.0
        %595 = vmatpush.xpose.msra.mxu0 0.0
        %596 = vmatpush.xpose.msra.mxu0 0.0
        %597 = vmatpush.xpose.msra.mxu0 0.0
        %598 = vmatpush.xpose.msra.mxu0 %v581
        %599 = vmatmul.f32.gmra.mxu0 %v579
        %v600 = vpop.f32.mrf.mxu0
        %v601 = vadd.f32 0.0, %v600
        %602 = vdwg.mxu0
        %v603 = vsel %vm380, %v601, -inf
        %604 = vmax.xlane.f32.xlu0 %v603
        %v605 = vpop.xlane.xlu0 %604
        %v606 = vsub.f32 %v601, %v605
        %v607 = vmul.f32 %v606, 1.442695
        %v608 = vpow.pop %v607
        %v609 = vsel %vm380, %v608, 0.0
        %610 = vadd.xlane.f32.xlu0 %v609
        %v611 = vpop.xlane.xlu0 %610
        %v612 = vrcp.pop %v611
        %v613 = vmul.f32 %v608, %v612
        %615 = vrot.lane.b32.xlu0 %v572, 80
        %v616 = vpop.permute.xlu0 %615
        %v619 = vsel %vm380, %v613, 0
        %621 = vmatpush.msra.mxu0 0.0
        %622 = vmatpush.msra.mxu0 0.0
        %623 = vmatpush.msra.mxu0 0.0
        %624 = vmatpush.msra.mxu0 0.0
        %625 = vmatpush.msra.mxu0 0.0
        %626 = vmatpush.msra.mxu0 0.0
        %627 = vmatpush.msra.mxu0 0.0
        %628 = vmatpush.msra.mxu0 0.0
        %629 = vmatpush.msra.mxu0 0.0
        %630 = vmatpush.msra.mxu0 0.0
        %631 = vmatpush.msra.mxu0 0.0
        %632 = vmatpush.msra.mxu0 0.0
        %633 = vmatpush.msra.mxu0 0.0
        %634 = vmatpush.msra.mxu0 0.0
        %635 = vmatpush.msra.mxu0 0.0
        %636 = vmatpush.msra.mxu0 %v616
        %637 = vmatmul.f32.gmra.mxu0 %v619
        %v638 = vpop.f32.mrf.mxu0
        %v639 = vadd.f32 0.0, %v638
        %640 = vdwg.mxu0
        %642 = vrot.lane.b32.xlu0 %v639, 48
        %v643 = vpop.permute.xlu0 %642
        %vm645 = vcmask 523648
        %646 = vst.msk [vmem:[#allocation5] sm:$0xff] %vm645, %v643
        %v647 = vld [vmem:[#allocation5] sm:$0xff]
        %v648 = vld [vmem:[%s4] sm:$0xff]
        %v649 = vld [vmem:[%s4 + $0x8] sm:$0xff]
        %v650 = vld [vmem:[%s4 + $0x10] sm:$0xff]
        %v651 = vld [vmem:[%s4 + $0x18] sm:$0xff]
        %v652 = vld [vmem:[%s4 + $0x20] sm:$0xff]
        %v653 = vld [vmem:[%s4 + $0x28] sm:$0xff]
        %v654 = vld [vmem:[%s4 + $0x30] sm:$0xff]
        %v655 = vld [vmem:[%s4 + $0x38] sm:$0xff]
        %v656 = vld [vmem:[%s5] sm:$0x1]
        %v658 = vperm.slane %v656, 0
        %v661 = vsel %vm298, %v647, 0
        %663 = vmatpush.msra.mxu0 0.0
        %664 = vmatpush.msra.mxu0 0.0
        %665 = vmatpush.msra.mxu0 0.0
        %666 = vmatpush.msra.mxu0 0.0
        %667 = vmatpush.msra.mxu0 0.0
        %668 = vmatpush.msra.mxu0 0.0
        %669 = vmatpush.msra.mxu0 0.0
        %670 = vmatpush.msra.mxu0 0.0
        %671 = vmatpush.msra.mxu0 %v655
        %672 = vmatpush.msra.mxu0 %v654
        %673 = vmatpush.msra.mxu0 %v653
        %674 = vmatpush.msra.mxu0 %v652
        %675 = vmatpush.msra.mxu0 %v651
        %676 = vmatpush.msra.mxu0 %v650
        %677 = vmatpush.msra.mxu0 %v649
        %678 = vmatpush.msra.mxu0 %v648
        %679 = vmatmul.f32.gmra.mxu0 %v661
        %v680 = vpop.f32.mrf.mxu0
        %v681 = vadd.f32 %v658, %v680
        %682 = vdwg.mxu0
        %683 = vst.msk [vmem:[%s268] sm:$0xff] %vm274, %v681
        %s684 = sand.u32 %s162, 1
        %s685 = scalar_lea.sflag [#allocation8], %s684
        %s686 = sand.u32 %s162, 1
        %s687 = smul.addr %s686, 8
        %s688 = scalar_lea.vmem [#allocation9], %s687
        // Predicated region
        $region49: #{tpu_custom_call.1} parent=43 // pred_check
          %p689 = pneg %p172
        $region50: #{tpu_custom_call.1} parent=43 // pred_check_branch
          %691 = sbr.rel (%p689) target = $region52
        $region51: #{tpu_custom_call.1} parent=43 // pred_region
          %693 = vsyncadd %s685, 0
          %s694 = smul.addr %s23, 8
          %s695 = scalar_lea.hbm %s6, %s694
          %s697 = sshll.u32 %s688, 4
          %s698 = int_to_ptr.vmem [resolvable:$true] %s697
          %s699 = sshll.u32 %s695, 4
          %s700 = int_to_ptr.hbm [resolvable:$true] %s699
          %702 = dma.vmem_to_hbm [thread:$0]  %s698, 128, %s700, %s685
        $region52: #{tpu_custom_call.1} parent=43 // pred_fallthru
          _
      $region44: #{tpu_custom_call.1} parent=5 // pred_fallthru
        _
      %p703 = scmp.le.s32.totalorder 2, %s18
      // Predicated region
      $region53: #{tpu_custom_call.1} parent=5 // pred_check
        %p704 = pneg %p703
      $region54: #{tpu_custom_call.1} parent=5 // pred_check_branch
        %706 = sbr.rel (%p704) target = $region56
      $region55: #{tpu_custom_call.1} parent=5 // pred_region
        %s707 = ssub.s32 %s18, 2
        // Predicated region
        $region57: #{tpu_custom_call.1} parent=55 // pred_check
          %p708 = pneg %p178
        $region58: #{tpu_custom_call.1} parent=55 // pred_check_branch
          %710 = sbr.rel (%p708) target = $region60
        $region59: #{tpu_custom_call.1} parent=55 // pred_region
          %s711 = sand.u32 %s163, 1
          %s712 = scalar_lea.sflag [#allocation8], %s711
          %s713 = sand.u32 %s163, 1
          %s714 = smul.addr %s713, 8
          %s715 = scalar_lea.vmem [#allocation9], %s714
          %717 = dma.done %s712, 128
        $region60: #{tpu_custom_call.1} parent=55 // pred_fallthru
          _
      $region56: #{tpu_custom_call.1} parent=5 // pred_fallthru
        _
    $region6: #{tpu_custom_call.1} parent=1 // loop_footer
      %s22 = sadd.s32 1, %s18
    $region7: #{tpu_custom_call.1} parent=1 // loop_footer_branch
      %17 = sbr.rel target = $region3
    $region8: #{tpu_custom_call.1} parent=1 // loop_exit
      _
    %718 = vsyncpa [#allocation7], 1
    %s719 = scalar_lea.sflag [#allocation7], 1
    %720 = vsyncpa %s719, 1
    %721 = vsyncpa [#allocation8], 1
    %s722 = scalar_lea.sflag [#allocation8], 1
    %723 = vsyncpa %s722, 1

</llo_original>
